<compile_context>
chip_gen: v7x
topology: tpu7x:2x2x1
jax: 0.10.0
libtpu: 0.0.40
codegen_flags: <defaults>
</compile_context>

<pallas_src>
import jax
import jax.numpy as jnp
from jax.experimental import pallas as pl
from jax.experimental.pallas import tpu as pltpu

_LANE = 128
# Total resident bytes (2 inputs + 2 outputs) allowed in the gridless path.
# Small enough for v5e's 16 MiB scoped default and so that anything bigger
# gets a multi-step pipelined grid (v7x megacore split, DMA overlap).
_SINGLE_BLOCK_BYTES = 2 * 1024 * 1024
_SCOPED_VMEM_BUDGET = 16 * 1024 * 1024  # tightest scoped-VMEM default (v5e)


def _vmem_capacity_bytes():
    try:
        return int(pltpu.get_tpu_info().vmem_capacity_bytes)
    except Exception:
        return 64 * 1024 * 1024  # assume v7x (smallest per-TC VMEM)


def _block_bytes_cap():
    # 2 inputs + 2 outputs, each double-buffered -> 8 block-sized buffers.
    # Keep their sum at <= half the (generation-aware) scoped budget.
    budget = min(_vmem_capacity_bytes(), _SCOPED_VMEM_BUDGET)
    return max(256 * 1024, budget // 16)  # ~1 MiB on every generation


def _sublane_for(dtype):
    # Native (sublane, 128) packing: 8 rows for 4-byte, 16 for 2-byte,
    # 32 for 1-byte dtypes.
    itemsize = jnp.dtype(dtype).itemsize
    return max(8, 32 // max(itemsize, 1))


def _copy2_kernel(x_ref, t_ref, ox_ref, ot_ref):
    # Pure elementwise pass-through of BOTH operands (the reference forward
    # defines no math); this is the skeleton a fused elementwise+reduction
    # loss kernel would start from.
    ox_ref[...] = x_ref[...]
    ot_ref[...] = t_ref[...]


def _to_lane_dense_2d(x):
    """Flatten `x` to a lane-dense (rows, width) slab.

    Picks the widest last dim in (1024, 512, 256, 128) that divides the
    payload so stores are unmasked lane-dense vst.  Pads (cheaply, <128
    elements) only when no width divides.  Returns (slab, n_valid_elements).
    """
    flat = x.reshape(-1)
    n = flat.shape[0]
    width = None
    for w in (1024, 512, 256, 128):
        if n % w == 0:
            width = w
            break
    if width is None:
        # TODO(synk): handle the ragged tail in-kernel (pl.BoundedSlice) once
        # real loss math needs exact element counts without padding.
        width = _LANE
        flat = jnp.pad(flat, (0, (-n) % width))
    rows = flat.shape[0] // width
    return flat.reshape(rows, width), n


def _alias_kwargs(alias):
    return {"input_output_aliases": {0: 0, 1: 1}} if alias else {}


def _copy_pair_single_block(x2d, t2d, *, alias=False):
    """Small-slab path: whole arrays resident in VMEM, no grid overhead."""
    vmem = pl.BlockSpec(memory_space=pltpu.MemorySpace.VMEM)
    return pl.pallas_call(
        _copy2_kernel,
        out_shape=(jax.ShapeDtypeStruct(x2d.shape, x2d.dtype),
                   jax.ShapeDtypeStruct(t2d.shape, t2d.dtype)),
        in_specs=[vmem, vmem],
        out_specs=(vmem, vmem),
        **_alias_kwargs(alias),
    )(x2d, t2d)


def _copy_pair_tiled(x2d, t2d, *, tile_r, alias=False):
    """Large-slab path: byte-capped lane-dense tiles, pl.cdiv grid.

    Partial last block (when tile_r doesn't divide R) is handled by Pallas'
    standard out-of-bounds masking, so no wrapper-side row padding is needed.
    """
    R, L = x2d.shape
    spec = pl.BlockSpec((tile_r, L), lambda i: (i, 0))
    return pl.pallas_call(
        _copy2_kernel,
        out_shape=(jax.ShapeDtypeStruct((R, L), x2d.dtype),
                   jax.ShapeDtypeStruct((R, L), t2d.dtype)),
        grid=(pl.cdiv(R, tile_r),),
        in_specs=[spec, spec],
        out_specs=(spec, spec),
        compiler_params=pltpu.CompilerParams(
            # Mem-bound copy: independent row tiles -> let v7x's 2 TCs split.
            dimension_semantics=("parallel",),
            # 8 x ~1 MiB buffers stays far below this on every generation.
            vmem_limit_bytes=_SCOPED_VMEM_BUDGET,
        ),
        **_alias_kwargs(alias),
    )(x2d, t2d)


def _pallas_copy_pair(x2d, t2d, *, alias=False):
    R, L = x2d.shape
    itemsize = jnp.dtype(x2d.dtype).itemsize
    total_resident = 2 * (x2d.size + t2d.size) * itemsize  # 2 in + 2 out
    if total_resident <= _SINGLE_BLOCK_BYTES:
        return _copy_pair_single_block(x2d, t2d, alias=alias)

    sub = _sublane_for(x2d.dtype)
    row_bytes = L * itemsize
    cap = _block_bytes_cap()
    tile_r = max(sub, (cap // row_bytes) // sub * sub)
    if tile_r >= R:
        # Whole slab fits in one capped block; full-extent rows are allowed.
        tile_r = R
    return _copy_pair_tiled(x2d, t2d, tile_r=tile_r, alias=alias)


class NewLoss:
    """JAX/Pallas port of the (empty) PyTorch NewLoss module."""

    def __init__(self, params=None):
        # Reference __init__ body is `pass` — no parameters to create.
        pass

    def __call__(self, inputs, targets):
        return self.forward(inputs, targets)

    def forward(self, inputs, targets):
        # TODO(synk): reference forward body is `pass` (returns None); no loss
        # computation exists to translate, so return None to match exactly.
        return None


def new_loss_forward(inputs, targets):
    return NewLoss()(inputs, targets)


if __name__ == "__main__":
    key = jax.random.PRNGKey(0)
    k1, k2, k3, k4 = jax.random.split(key, 4)

    # --- Small shapes consistent with a segmentation-style loss input. ------
    B, C, H, W = 2, 4, 16, 16                       # NCHW
    inputs = jax.random.normal(k1, (B, C, H, W), dtype=jnp.float32)
    targets = jax.random.normal(k2, (B, C, H, W), dtype=jnp.float32)

    # Exercise the two-operand single-block Pallas path (tiny slab in VMEM).
    x2d, n_valid = _to_lane_dense_2d(inputs)
    t2d, _ = _to_lane_dense_2d(targets)
    ox, ot = _pallas_copy_pair(x2d, t2d)
    jax.block_until_ready((ox, ot))
    assert jnp.allclose(ox.reshape(-1)[:n_valid], inputs.reshape(-1))
    assert jnp.allclose(ot.reshape(-1)[:n_valid], targets.reshape(-1))

    # Exercise the byte-capped tiled path (ragged row count -> cdiv grid with
    # a partial last block; still small enough to run instantly).
    big_in = jax.random.normal(k3, (10, 4, 128, 128), dtype=jnp.float32)
    big_tg = jax.random.normal(k4, (10, 4, 128, 128), dtype=jnp.float32)
    bx2d, bn_valid = _to_lane_dense_2d(big_in)
    bt2d, _ = _to_lane_dense_2d(big_tg)
    box, bot = _pallas_copy_pair(bx2d, bt2d)
    jax.block_until_ready((box, bot))
    assert jnp.allclose(box.reshape(-1)[:bn_valid], big_in.reshape(-1))
    assert jnp.allclose(bot.reshape(-1)[:bn_valid], big_tg.reshape(-1))

    # Exact-semantics forward: returns None (empty reference forward).
    result = new_loss_forward(inputs, targets)
    assert result is None

    print("KERNEL_OK")
</pallas_src>

<mosaic_0001>
module attributes {stable_mosaic.version = 11 : i64} {
  func.func @_copy2_kernel(%arg0: memref<2x1024xf32, #tpu.memory_space<vmem>>, %arg1: memref<2x1024xf32, #tpu.memory_space<vmem>>, %arg2: memref<2x1024xf32, #tpu.memory_space<vmem>>, %arg3: memref<2x1024xf32, #tpu.memory_space<vmem>>) attributes {dimension_semantics = [], scalar_prefetch = 0 : i64, scratch_operands = 0 : i64, tpu.core_type = #tpu.core_type<tc>} {
    %c0 = arith.constant 0 : index
    %c0_0 = arith.constant 0 : index
    %0 = vector.load %arg0[%c0, %c0_0] : memref<2x1024xf32, #tpu.memory_space<vmem>>, vector<2x1024xf32>
    %c0_1 = arith.constant 0 : index
    %c0_2 = arith.constant 0 : index
    %1 = vector.load %arg2[%c0_1, %c0_2] : memref<2x1024xf32, #tpu.memory_space<vmem>>, vector<2x1024xf32>
    tpu.vector_store %arg2[%c0_1, %c0_2], %0 {strides = array<i32>} : memref<2x1024xf32, #tpu.memory_space<vmem>>, vector<2x1024xf32>,
    %c0_3 = arith.constant 0 : index
    %c0_4 = arith.constant 0 : index
    %2 = vector.load %arg1[%c0_3, %c0_4] : memref<2x1024xf32, #tpu.memory_space<vmem>>, vector<2x1024xf32>
    %c0_5 = arith.constant 0 : index
    %c0_6 = arith.constant 0 : index
    %3 = vector.load %arg3[%c0_5, %c0_6] : memref<2x1024xf32, #tpu.memory_space<vmem>>, vector<2x1024xf32>
    tpu.vector_store %arg3[%c0_5, %c0_6], %2 {strides = array<i32>} : memref<2x1024xf32, #tpu.memory_space<vmem>>, vector<2x1024xf32>,
    return
  }
}

</mosaic_0001>

<llo_original>
// kernel: tpu_custom_call.1
$region0: #{tpu_custom_call.1}
  #allocation0 [shape = 'u32[]', space=smem, size = 0x4, offset = 0x4, fixed_abs, tag = 'smem constant byte address 0x4 - core index']
  #allocation1 [shape = 'u32[144,128]{1,0:T(1,128)}', space=vmem, size = 0x12000, scoped, tag = 'internal scratch']
  %s0 = inlined_call_operand.hbm [shape: f32[2,1024], index: 0, kind: input, shape index: {}]
  %s1 = inlined_call_operand.hbm [shape: f32[2,1024], index: 1, kind: input, shape index: {}]
  %s2 = inlined_call_operand.hbm [shape: f32[2,1024], index: 2, kind: output, shape index: {0}]
  %s3 = inlined_call_operand.hbm [shape: f32[2,1024], index: 3, kind: output, shape index: {1}]
  %4 = xla_tuple %s2, %s3
  %s5 = sld [smem:[#allocation0]]
  $region34: #{tpu_custom_call.1} parent=0
    _
  %s7 = ssub.s32 1, %s5
  %s8 = scalar_select 0, %s7, %s5
  $region1: #{tpu_custom_call.1} parent=0
    #allocation2 [shape = 'u8[8192]{0}', space=vmem, size = 0x2000, scoped, tag = 'input window, operand 0, single buffered']
    #allocation3 [shape = 's32[1]{0}', space=sflag, size = 0x4, scoped, tag = 'scoped memory for tpu_custom_call.1']
    #allocation4 [shape = 's32[1]{0}', space=sflag, size = 0x4, scoped, tag = 'scoped memory for tpu_custom_call.1']
    #allocation5 [shape = 'u8[8192]{0}', space=vmem, size = 0x2000, scoped, tag = 'input window, operand 1, single buffered']
    #allocation6 [shape = 's32[1]{0}', space=sflag, size = 0x4, scoped, tag = 'scoped memory for tpu_custom_call.1']
    #allocation7 [shape = 'u8[8192]{0}', space=vmem, size = 0x2000, scoped, tag = 'output window, operand 0, single buffered']
    #allocation8 [shape = 'u8[8192]{0}', space=vmem, size = 0x2000, scoped, tag = 'output window, operand 1, single buffered']
    #allocation9 [shape = 's32[1]{0}', space=sflag, size = 0x4, scoped, tag = 'scoped memory for tpu_custom_call.1']
    %9 = vsyncpa [#allocation3], 0
    %10 = vsyncpa [#allocation6], 0
    %11 = vsyncpa [#allocation4], 0
    %12 = vsyncpa [#allocation9], 0
    // Predicated region
    $region2: #{tpu_custom_call.1} parent=1 // pred_check
      _
    $region3: #{tpu_custom_call.1} parent=1 // pred_check_branch
      %14 = sbr.rel (0) target = $region5
    $region4: #{tpu_custom_call.1} parent=1 // pred_region
      %s16 = ssub.s32 256, 256
      %17 = vsyncadd [#allocation3], %s16
      %s19 = sshll.u32 [#allocation2], 4
      %s20 = int_to_ptr.vmem [resolvable:$true] %s19
      %22 = dma.hbm_to_vmem [thread:$0]  %s0, 256, %s20, [#allocation3]
    $region5: #{tpu_custom_call.1} parent=1 // pred_fallthru
      _
    // Predicated region
    $region6: #{tpu_custom_call.1} parent=1 // pred_check
      _
    $region7: #{tpu_custom_call.1} parent=1 // pred_check_branch
      %24 = sbr.rel (0) target = $region9
    $region8: #{tpu_custom_call.1} parent=1 // pred_region
      %s26 = ssub.s32 256, 256
      %27 = vsyncadd [#allocation6], %s26
      %s29 = sshll.u32 [#allocation5], 4
      %s30 = int_to_ptr.vmem [resolvable:$true] %s29
      %32 = dma.hbm_to_vmem [thread:$0]  %s1, 256, %s30, [#allocation6]
    $region9: #{tpu_custom_call.1} parent=1 // pred_fallthru
      _
    // Predicated region
    $region10: #{tpu_custom_call.1} parent=1 // pred_check
      _
    $region11: #{tpu_custom_call.1} parent=1 // pred_check_branch
      %34 = sbr.rel (0) target = $region13
    $region12: #{tpu_custom_call.1} parent=1 // pred_region
      %35 = dma.done [#allocation3], 256
    $region13: #{tpu_custom_call.1} parent=1 // pred_fallthru
      _
    // Predicated region
    $region14: #{tpu_custom_call.1} parent=1 // pred_check
      _
    $region15: #{tpu_custom_call.1} parent=1 // pred_check_branch
      %37 = sbr.rel (0) target = $region17
    $region16: #{tpu_custom_call.1} parent=1 // pred_region
      %38 = dma.done [#allocation6], 256
    $region17: #{tpu_custom_call.1} parent=1 // pred_fallthru
      _
    %v39 = vld [vmem:[#allocation2] sm:$0xff]
    %v40 = vld [vmem:[#allocation2 + $0x8] sm:$0xff]
    %41 = vst [vmem:[#allocation7] sm:$0xff] %v39
    %42 = vst [vmem:[#allocation7 + $0x8] sm:$0xff] %v40
    %v43 = vld [vmem:[#allocation5] sm:$0xff]
    %v44 = vld [vmem:[#allocation5 + $0x8] sm:$0xff]
    %45 = vst [vmem:[#allocation8] sm:$0xff] %v43
    %46 = vst [vmem:[#allocation8 + $0x8] sm:$0xff] %v44
    // Predicated region
    $region18: #{tpu_custom_call.1} parent=1 // pred_check
      _
    $region19: #{tpu_custom_call.1} parent=1 // pred_check_branch
      %48 = sbr.rel (0) target = $region21
    $region20: #{tpu_custom_call.1} parent=1 // pred_region
      %s50 = ssub.s32 256, 256
      %51 = vsyncadd [#allocation4], %s50
      %s53 = sshll.u32 [#allocation7], 4
      %s54 = int_to_ptr.vmem [resolvable:$true] %s53
      %56 = dma.vmem_to_hbm [thread:$0]  %s54, 256, %s2, [#allocation4]
    $region21: #{tpu_custom_call.1} parent=1 // pred_fallthru
      _
    // Predicated region
    $region22: #{tpu_custom_call.1} parent=1 // pred_check
      _
    $region23: #{tpu_custom_call.1} parent=1 // pred_check_branch
      %58 = sbr.rel (0) target = $region25
    $region24: #{tpu_custom_call.1} parent=1 // pred_region
      %s60 = ssub.s32 256, 256
      %61 = vsyncadd [#allocation9], %s60
      %s63 = sshll.u32 [#allocation8], 4
      %s64 = int_to_ptr.vmem [resolvable:$true] %s63
      %66 = dma.vmem_to_hbm [thread:$0]  %s64, 256, %s3, [#allocation9]
    $region25: #{tpu_custom_call.1} parent=1 // pred_fallthru
      _
    // Predicated region
    $region26: #{tpu_custom_call.1} parent=1 // pred_check
      _
    $region27: #{tpu_custom_call.1} parent=1 // pred_check_branch
      %68 = sbr.rel (0) target = $region29
    $region28: #{tpu_custom_call.1} parent=1 // pred_region
      %69 = dma.done [#allocation4], 256
    $region29: #{tpu_custom_call.1} parent=1 // pred_fallthru
      _
    // Predicated region
    $region30: #{tpu_custom_call.1} parent=1 // pred_check
      _
    $region31: #{tpu_custom_call.1} parent=1 // pred_check_branch
      %71 = sbr.rel (0) target = $region33
    $region32: #{tpu_custom_call.1} parent=1 // pred_region
      %72 = dma.done [#allocation9], 256
    $region33: #{tpu_custom_call.1} parent=1 // pred_fallthru
      _
    %73 = vsyncpa [#allocation3], 1
    %74 = vsyncpa [#allocation6], 1
    %75 = vsyncpa [#allocation4], 1
    %76 = vsyncpa [#allocation9], 1

</llo_original>
